<compile_context>
chip_gen: v7x
topology: tpu7x:2x2x1
jax: 0.10.0
libtpu: 0.0.40
codegen_flags: <defaults>
</compile_context>

<pallas_src>
import functools

import jax
import jax.numpy as jnp
from jax.experimental import pallas as pl
from jax.experimental.pallas import tpu as pltpu


def _round_up(x, m):
    return ((x + m - 1) // m) * m


def _vmem_limit_bytes():
    """Generation-aware scoped-VMEM limit: ~3/4 of physical VMEM, capped at 96 MiB.

    v5e/v6e have 128 MiB of VMEM per TensorCore -> 96 MiB; v7x has 64 MiB ->
    48 MiB.  Falls back to the tightest (v7x) value if the query is unavailable.
    """
    phys = 64 << 20
    try:
        info = pltpu.get_tpu_info()
        v = getattr(info, "vmem_capacity_bytes", None)
        if v:
            phys = int(v)
    except Exception:
        pass
    return int(min(96 << 20, max(32 << 20, (phys * 3) // 4)))


# Conservative estimate of live f32 temporaries per tile element inside the
# kernel (upcasts, logits, exp(logits)*neg, mask*logits, ...).  Keeps enough
# headroom under vmem_limit_bytes that the largest picked tile still compiles.
_TEMP_BYTES_PER_ELEM = 24


def _pick_row_tile(bsz, itemsizes, vmem_limit):
    """Largest row tile such that
       (a) double-buffered input tiles + f32 temporaries fit the VMEM limit,
       (b) the grid has >= ~4 steps (DMA/compute overlap; never a 1-step grid),
       (c) tm is a multiple of the packed sublane count of the narrowest input
           dtype (8 rows for f32, 16 for bf16, 32 for int8)."""
    cols_pad = _round_up(bsz, 128)          # lane padding Mosaic applies in VMEM
    per_row = cols_pad * (2 * sum(itemsizes) + _TEMP_BYTES_PER_ELEM)
    tm = int(vmem_limit * 0.85) // per_row
    tm = min(tm, 1024)
    tm = min(tm, max(8, _round_up(pl.cdiv(bsz, 4), 8)))
    sub = 8 * (4 // min(itemsizes))
    tm = max(sub, (tm // sub) * sub)
    if tm >= bsz:
        return bsz                          # single full-extent block is always legal
    return tm


def _clamp_row_tile(row_tile, bsz):
    tm = int(row_tile)
    if tm >= bsz:
        return bsz
    return max(8, (tm // 8) * 8)


def _row_loss_kernel(*refs, inv_base_temp, use_neg):
    """Fused per-row SoftSupCon loss for one (tm, bsz) tile -> (tm, 1) f32."""
    out_ref = refs[-1]
    sims = refs[0][...].astype(jnp.float32) * inv_base_temp   # VPU multiply, not divide
    mask = refs[1][...].astype(jnp.float32)

    row_max = jnp.max(sims, axis=1, keepdims=True)
    logits = sims - row_max
    exp_logits = jnp.exp(logits)
    if use_neg:
        exp_logits = exp_logits * refs[2][...].astype(jnp.float32)
    # Rows whose neg_mask is entirely zero give log(1e-12) ~ -27.6, exactly as
    # in the PyTorch reference (intended behavior).
    denom = jnp.sum(exp_logits, axis=1, keepdims=True) + 1e-12

    mask_sum = jnp.sum(mask, axis=1, keepdims=True)
    mask_logit_sum = jnp.sum(mask * logits, axis=1, keepdims=True)
    # Algebraic fusion of sum(mask * (logits - log(denom)), axis=1)
    #   = sum(mask * logits) - log(denom) * sum(mask)
    # drops two full [tm, bsz] element-wise passes and their temporaries.
    mean_log_prob_pos = (mask_logit_sum - jnp.log(denom) * mask_sum) / (mask_sum + 1e-6)
    out_ref[...] = -mean_log_prob_pos


def soft_sup_con_loss(
    sims,
    mask=None,
    neg_mask=None,
    reduction="mean",
    temperature=0.07,
    contrast_mode="all",
    base_temperature=0.07,
    row_tile=None,
):
    """JAX/Pallas equivalent of SoftSupConLoss.forward.

    Like the PyTorch module's forward, `temperature` and `contrast_mode` are
    accepted but unused (the forward only divides by base_temperature)."""
    bsz = sims.shape[0]
    assert sims.shape == (bsz, bsz)
    if mask is None:
        # Degenerate (SimCLR-style) fallback: all pairs weighted equally.
        mask = jnp.ones((bsz, bsz), dtype=sims.dtype)

    use_neg = neg_mask is not None
    inputs = [sims, mask] + ([neg_mask] if use_neg else [])
    itemsizes = [jnp.dtype(a.dtype).itemsize for a in inputs]

    vmem_limit = _vmem_limit_bytes()
    if row_tile is not None:
        tm = _clamp_row_tile(row_tile, bsz)
    else:
        tm = _pick_row_tile(bsz, itemsizes, vmem_limit)
    num_tiles = pl.cdiv(bsz, tm)

    # Rows tiled by tm (last tile may be a partial edge block); columns always
    # span the full logical width bsz, so no host-side padding pass is needed.
    in_specs = [pl.BlockSpec((tm, bsz), lambda i: (i, 0)) for _ in inputs]
    kernel = functools.partial(
        _row_loss_kernel,
        inv_base_temp=1.0 / float(base_temperature),
        use_neg=use_neg,
    )

    losses = pl.pallas_call(
        kernel,
        out_shape=jax.ShapeDtypeStruct((num_tiles * tm, 1), jnp.float32),
        grid_spec=pltpu.PrefetchScalarGridSpec(
            num_scalar_prefetch=0,
            grid=(num_tiles,),
            in_specs=in_specs,
            out_specs=pl.BlockSpec((tm, 1), lambda i: (i, 0)),
        ),
        compiler_params=pltpu.CompilerParams(
            # Row tiles are fully independent -> grid axis shards across both
            # TensorCores on v7x (no carried accumulator in the kernel).
            dimension_semantics=("parallel",),
            vmem_limit_bytes=vmem_limit,
        ),
    )(*inputs)

    losses = losses[:bsz, 0]        # drop garbage rows of a partial edge tile
    if reduction == "mean":
        return jnp.sum(losses) / bsz
    return losses


def _reference_rows(sims, mask, neg_mask, base_temperature=0.07):
    # Pure-JAX reference mirroring the PyTorch forward (per-row losses).
    sims = sims / base_temperature
    logits_max = jnp.max(sims, axis=1, keepdims=True)
    logits = sims - logits_max
    exp_logits = jnp.exp(logits) * neg_mask
    log_prob = logits - jnp.log(jnp.sum(exp_logits, axis=1, keepdims=True) + 1e-12)
    mean_log_prob_pos = jnp.sum(mask * log_prob, axis=1) / (jnp.sum(mask, axis=1) + 1e-06)
    return -mean_log_prob_pos


def _reference_mean(sims, mask, neg_mask, base_temperature=0.07):
    return jnp.mean(_reference_rows(sims, mask, neg_mask, base_temperature))


if __name__ == "__main__":
    key = jax.random.PRNGKey(0)
    k_sims, k_mask, k_neg = jax.random.split(key, 3)

    bsz = 256
    sims = jax.random.uniform(k_sims, (bsz, bsz), dtype=jnp.float32, minval=-1.0, maxval=1.0)
    mask = jax.random.uniform(k_mask, (bsz, bsz), dtype=jnp.float32)        # soft positives
    neg_mask = (jax.random.uniform(k_neg, (bsz, bsz)) > 0.2).astype(jnp.float32)

    # 1) f32, mean reduction, explicit 128-row tiles (grid=(2,)).
    loss = jax.block_until_ready(
        soft_sup_con_loss(sims, mask, neg_mask, reduction="mean", row_tile=128))
    ref = jax.block_until_ready(_reference_mean(sims, mask, neg_mask))
    assert jnp.allclose(loss, ref, atol=1e-3, rtol=1e-4), (loss, ref)

    # 2) per-row losses, auto-picked tile (grid of >= 4 steps).
    per_row = jax.block_until_ready(soft_sup_con_loss(sims, mask, neg_mask, reduction="none"))
    ref_rows = jax.block_until_ready(_reference_rows(sims, mask, neg_mask))
    assert per_row.shape == (bsz,)
    assert jnp.allclose(per_row, ref_rows, atol=1e-3, rtol=1e-4)

    # 3) Ragged batch (not a multiple of 128 or 8): exercises the un-padded
    #    full-width column blocks and the partial edge row tile.
    b2 = 137
    s2, m2, n2 = sims[:b2, :b2], mask[:b2, :b2], neg_mask[:b2, :b2]
    loss2 = jax.block_until_ready(soft_sup_con_loss(s2, m2, n2, reduction="mean"))
    rows2 = jax.block_until_ready(soft_sup_con_loss(s2, m2, n2, reduction="none"))
    assert jnp.allclose(loss2, _reference_mean(s2, m2, n2), atol=1e-3, rtol=1e-4)
    assert rows2.shape == (b2,)
    assert jnp.allclose(rows2, _reference_rows(s2, m2, n2), atol=1e-3, rtol=1e-4)

    # 4) bf16 inputs (half the HBM traffic); math is f32 in-kernel, compared
    #    against the f32 reference evaluated on the same bf16-rounded values.
    sims_b, mask_b, neg_b = (a.astype(jnp.bfloat16) for a in (sims, mask, neg_mask))
    loss_b = jax.block_until_ready(soft_sup_con_loss(sims_b, mask_b, neg_b, reduction="mean"))
    ref_b = _reference_mean(sims_b.astype(jnp.float32), mask_b.astype(jnp.float32),
                            neg_b.astype(jnp.float32))
    assert jnp.allclose(loss_b, ref_b, atol=1e-3, rtol=1e-4), (loss_b, ref_b)

    # 5) neg_mask=None: the kernel skips that input stream entirely.
    loss_nn = jax.block_until_ready(soft_sup_con_loss(sims, mask, None, reduction="mean"))
    ref_nn = _reference_mean(sims, mask, jnp.ones_like(mask))
    assert jnp.allclose(loss_nn, ref_nn, atol=1e-3, rtol=1e-4), (loss_nn, ref_nn)

    print("KERNEL_OK")
</pallas_src>

<mosaic_0001>
module attributes {stable_mosaic.version = 11 : i64} {
  func.func @_row_loss_kernel(%arg0: i32, %arg1: memref<128x256xf32, #tpu.memory_space<vmem>>, %arg2: memref<128x256xf32, #tpu.memory_space<vmem>>, %arg3: memref<128x256xf32, #tpu.memory_space<vmem>>, %arg4: memref<128x1xf32, #tpu.memory_space<vmem>>) attributes {dimension_semantics = [#tpu.dimension_semantics<parallel>], iteration_bounds = array<i64: 2>, scalar_prefetch = 0 : i64, scratch_operands = 0 : i64, tpu.core_type = #tpu.core_type<tc>, window_params = [{transform_indices = @transform_0, window_bounds = array<i64: 128, 256>}, {transform_indices = @transform_1, window_bounds = array<i64: 128, 256>}, {transform_indices = @transform_2, window_bounds = array<i64: 128, 256>}, {transform_indices = @transform_3, window_bounds = array<i64: 128, 1>}]} {
    %c0 = arith.constant 0 : index
    %c0_0 = arith.constant 0 : index
    %0 = vector.load %arg1[%c0, %c0_0] : memref<128x256xf32, #tpu.memory_space<vmem>>, vector<128x256xf32>
    %cst = arith.constant 14.2857141 : f32
    %1 = vector.broadcast %cst : f32 to vector<128x256xf32>
    %2 = arith.mulf %0, %1 : vector<128x256xf32>
    %c0_1 = arith.constant 0 : index
    %c0_2 = arith.constant 0 : index
    %3 = vector.load %arg2[%c0_1, %c0_2] : memref<128x256xf32, #tpu.memory_space<vmem>>, vector<128x256xf32>
    %cst_3 = arith.constant dense<0xFF800000> : vector<128xf32>
    %4 = vector.multi_reduction <maximumf>, %2, %cst_3 [1] : vector<128x256xf32> to vector<128xf32>
    %5 = vector.shape_cast %4 : vector<128xf32> to vector<128x1xf32>
    %6 = vector.broadcast %5 : vector<128x1xf32> to vector<128x256xf32>
    %7 = arith.subf %2, %6 : vector<128x256xf32>
    %8 = math.exp %7 : vector<128x256xf32>
    %c0_4 = arith.constant 0 : index
    %c0_5 = arith.constant 0 : index
    %9 = vector.load %arg3[%c0_4, %c0_5] : memref<128x256xf32, #tpu.memory_space<vmem>>, vector<128x256xf32>
    %10 = arith.mulf %8, %9 : vector<128x256xf32>
    %cst_6 = arith.constant dense<0.000000e+00> : vector<128xf32>
    %11 = vector.multi_reduction <add>, %10, %cst_6 [1] : vector<128x256xf32> to vector<128xf32>
    %12 = vector.shape_cast %11 : vector<128xf32> to vector<128x1xf32>
    %cst_7 = arith.constant 9.99999996E-13 : f32
    %13 = vector.broadcast %cst_7 : f32 to vector<128x1xf32>
    %14 = arith.addf %12, %13 : vector<128x1xf32>
    %cst_8 = arith.constant dense<0.000000e+00> : vector<128xf32>
    %15 = vector.multi_reduction <add>, %3, %cst_8 [1] : vector<128x256xf32> to vector<128xf32>
    %16 = vector.shape_cast %15 : vector<128xf32> to vector<128x1xf32>
    %17 = arith.mulf %3, %7 : vector<128x256xf32>
    %cst_9 = arith.constant dense<0.000000e+00> : vector<128xf32>
    %18 = vector.multi_reduction <add>, %17, %cst_9 [1] : vector<128x256xf32> to vector<128xf32>
    %19 = vector.shape_cast %18 : vector<128xf32> to vector<128x1xf32>
    %20 = math.log %14 : vector<128x1xf32>
    %21 = arith.mulf %20, %16 : vector<128x1xf32>
    %22 = arith.subf %19, %21 : vector<128x1xf32>
    %cst_10 = arith.constant 9.99999997E-7 : f32
    %23 = vector.broadcast %cst_10 : f32 to vector<128x1xf32>
    %24 = arith.addf %16, %23 : vector<128x1xf32>
    %25 = arith.divf %22, %24 : vector<128x1xf32>
    %cst_11 = arith.constant 0.000000e+00 : f32
    %26 = vector.broadcast %cst_11 : f32 to vector<128x1xf32>
    %27 = arith.subf %26, %25 : vector<128x1xf32>
    %c0_12 = arith.constant 0 : index
    %c0_13 = arith.constant 0 : index
    %28 = vector.load %arg4[%c0_12, %c0_13] : memref<128x1xf32, #tpu.memory_space<vmem>>, vector<128x1xf32>
    tpu.vector_store %arg4[%c0_12, %c0_13], %27 {strides = array<i32>} : memref<128x1xf32, #tpu.memory_space<vmem>>, vector<128x1xf32>,
    return
  }
  func.func @transform_0(%arg0: i32) -> (i32, i32) {
    %c0_i32 = arith.constant 0 : i32
    %c0_i32_0 = arith.constant 0 : i32
    return %arg0, %c0_i32 : i32, i32
  }
  func.func @transform_1(%arg0: i32) -> (i32, i32) {
    %c0_i32 = arith.constant 0 : i32
    %c0_i32_0 = arith.constant 0 : i32
    return %arg0, %c0_i32 : i32, i32
  }
  func.func @transform_2(%arg0: i32) -> (i32, i32) {
    %c0_i32 = arith.constant 0 : i32
    %c0_i32_0 = arith.constant 0 : i32
    return %arg0, %c0_i32 : i32, i32
  }
  func.func @transform_3(%arg0: i32) -> (i32, i32) {
    %c0_i32 = arith.constant 0 : i32
    %c0_i32_0 = arith.constant 0 : i32
    return %arg0, %c0_i32 : i32, i32
  }
}

</mosaic_0001>

<llo_original>
// kernel: tpu_custom_call.1
$region0: #{tpu_custom_call.1}
  #allocation0 [shape = 'u32[]', space=smem, size = 0x4, offset = 0x4, fixed_abs, tag = 'smem constant byte address 0x4 - core index']
  #allocation1 [shape = 'u32[144,128]{1,0:T(1,128)}', space=vmem, size = 0x12000, scoped, tag = 'internal scratch']
  %s0 = inlined_call_operand.hbm [shape: f32[256,256], index: 0, kind: input, shape index: {}]
  %s1 = inlined_call_operand.hbm [shape: f32[256,256], index: 1, kind: input, shape index: {}]
  %s2 = inlined_call_operand.hbm [shape: f32[256,256], index: 2, kind: input, shape index: {}]
  %s3 = inlined_call_operand.vmem [shape: f32[256,1], index: 3, kind: output, shape index: {}]
  %s4 = sld [smem:[#allocation0]]
  $region57: #{tpu_custom_call.1} parent=0
    _
  %s6 = ssub.s32 1, %s4
  %s7 = scalar_select 0, %s6, %s4
  $region1: #{tpu_custom_call.1} parent=0
    #allocation2 [shape = 'u8[262144]{0}', space=vmem, size = 0x40000, scoped, tag = 'input window, operand 0']
    #allocation3 [shape = 's32[2]{0}', space=sflag, size = 0x8, scoped, tag = 'scoped memory for tpu_custom_call.1']
    #allocation4 [shape = 'u8[262144]{0}', space=vmem, size = 0x40000, scoped, tag = 'input window, operand 1']
    #allocation5 [shape = 's32[2]{0}', space=sflag, size = 0x8, scoped, tag = 'scoped memory for tpu_custom_call.1']
    #allocation6 [shape = 'u8[262144]{0}', space=vmem, size = 0x40000, scoped, tag = 'input window, operand 2']
    %8 = vsyncpa [#allocation3], 0
    %s9 = scalar_lea.sflag [#allocation3], 1
    %10 = vsyncpa %s9, 0
    %11 = vsyncpa [#allocation5], 0
    %s12 = scalar_lea.sflag [#allocation5], 1
    %13 = vsyncpa %s12, 0
    loop: start=0, step=1, limit=4
    $region2: #{tpu_custom_call.1} parent=1 // loop_pre_header
      _
    $region3: #{tpu_custom_call.1} parent=1 // loop_header
      %s15 = sphi 0, %s19
      %p16 = scmp.ge.s32.totalorder %s15, 4
      %s25 = sphi 0, %s27
      %s28 = sphi 0, %s25
      %s29 = sphi 0, %s28
      %s45 = sphi 0, %s29
      %s51 = sphi 0, %s53
      %s54 = sphi 0, %s51
      %s55 = sphi 0, %s54
      %s71 = sphi 0, %s55
      %s77 = sphi 0, %s79
      %s80 = sphi 0, %s77
      %s81 = sphi 0, %s80
      %s97 = sphi 0, %s81
      %s103 = sphi 0, %s105
      %s106 = sphi 0, %s103
      %s107 = sphi 0, %s106
      %s123 = sphi 0, %s107
    $region4: #{tpu_custom_call.1} parent=1 // loop_header_branch
      %18 = sbr.rel (%p16) target = $region8
    $region5: #{tpu_custom_call.1} parent=1 // loop_body
      %s20 = ssub.s32 %s15, 1
      %s21 = ssub.s32 %s15, 2
      %s22 = sadd.s32 %s15, 1
      %s23 = ssub.s32 %s15, %s22
      %p24 = scmp.eq.s32.totalorder %s23, 0
      %s26 = sadd.s32 %s25, 1
      %s27 = scalar_select %p24, %s25, %s26
      %p30 = pneg %p24
      %p31 = scmp.eq.s32.totalorder %s15, 1
      %p32 = por %p30, %p31
      %p33 = scmp.ne.s32.totalorder %s25, %s28
      %p34 = scmp.eq.s32.totalorder %s15, 0
      %p35 = por %p33, %p34
      %p36 = scmp.ne.s32.totalorder %s25, %s28
      %p37 = scmp.eq.s32.totalorder %s20, 1
      %p38 = por %p36, %p37
      %p39 = scmp.ne.s32.totalorder %s28, %s29
      %p40 = scmp.eq.s32.totalorder %s20, 0
      %p41 = por %p39, %p40
      %p42 = scmp.ne.s32.totalorder %s28, %s29
      %p43 = scmp.eq.s32.totalorder %s21, 1
      %p44 = por %p42, %p43
      %p46 = scmp.ne.s32.totalorder %s29, %s45
      %p47 = scmp.eq.s32.totalorder %s21, 0
      %p48 = por %p46, %p47
      %s49 = ssub.s32 %s15, %s22
      %p50 = scmp.eq.s32.totalorder %s49, 0
      %s52 = sadd.s32 %s51, 1
      %s53 = scalar_select %p50, %s51, %s52
      %p56 = pneg %p50
      %p57 = scmp.eq.s32.totalorder %s15, 1
      %p58 = por %p56, %p57
      %p59 = scmp.ne.s32.totalorder %s51, %s54
      %p60 = scmp.eq.s32.totalorder %s15, 0
      %p61 = por %p59, %p60
      %p62 = scmp.ne.s32.totalorder %s51, %s54
      %p63 = scmp.eq.s32.totalorder %s20, 1
      %p64 = por %p62, %p63
      %p65 = scmp.ne.s32.totalorder %s54, %s55
      %p66 = scmp.eq.s32.totalorder %s20, 0
      %p67 = por %p65, %p66
      %p68 = scmp.ne.s32.totalorder %s54, %s55
      %p69 = scmp.eq.s32.totalorder %s21, 1
      %p70 = por %p68, %p69
      %p72 = scmp.ne.s32.totalorder %s55, %s71
      %p73 = scmp.eq.s32.totalorder %s21, 0
      %p74 = por %p72, %p73
      %s75 = ssub.s32 %s15, %s22
      %p76 = scmp.eq.s32.totalorder %s75, 0
      %s78 = sadd.s32 %s77, 1
      %s79 = scalar_select %p76, %s77, %s78
      %p82 = pneg %p76
      %p83 = scmp.eq.s32.totalorder %s15, 1
      %p84 = por %p82, %p83
      %p85 = scmp.ne.s32.totalorder %s77, %s80
      %p86 = scmp.eq.s32.totalorder %s15, 0
      %p87 = por %p85, %p86
      %p88 = scmp.ne.s32.totalorder %s77, %s80
      %p89 = scmp.eq.s32.totalorder %s20, 1
      %p90 = por %p88, %p89
      %p91 = scmp.ne.s32.totalorder %s80, %s81
      %p92 = scmp.eq.s32.totalorder %s20, 0
      %p93 = por %p91, %p92
      %p94 = scmp.ne.s32.totalorder %s80, %s81
      %p95 = scmp.eq.s32.totalorder %s21, 1
      %p96 = por %p94, %p95
      %p98 = scmp.ne.s32.totalorder %s81, %s97
      %p99 = scmp.eq.s32.totalorder %s21, 0
      %p100 = por %p98, %p99
      %s101 = ssub.s32 %s15, %s22
      %p102 = scmp.eq.s32.totalorder %s101, 0
      %s104 = sadd.s32 %s103, 1
      %s105 = scalar_select %p102, %s103, %s104
      %p108 = pneg %p102
      %p109 = scmp.eq.s32.totalorder %s15, 1
      %p110 = por %p108, %p109
      %p111 = scmp.ne.s32.totalorder %s103, %s106
      %p112 = scmp.eq.s32.totalorder %s15, 0
      %p113 = por %p111, %p112
      %p114 = scmp.ne.s32.totalorder %s103, %s106
      %p115 = scmp.eq.s32.totalorder %s20, 1
      %p116 = por %p114, %p115
      %p117 = scmp.ne.s32.totalorder %s106, %s107
      %p118 = scmp.eq.s32.totalorder %s20, 0
      %p119 = por %p117, %p118
      %p120 = scmp.ne.s32.totalorder %s106, %s107
      %p121 = scmp.eq.s32.totalorder %s21, 1
      %p122 = por %p120, %p121
      %p124 = scmp.ne.s32.totalorder %s107, %s123
      %p125 = scmp.eq.s32.totalorder %s21, 0
      %p126 = por %p124, %p125
      %p127 = scmp.le.s32.totalorder 1, %s15
      %p128 = scmp.lt.s32.totalorder %s15, 3
      %p129 = pnand %p127, %p128
      %p130 = pneg %p129
      // Predicated region
      $region9: #{tpu_custom_call.1} parent=5 // pred_check
        _
      $region10: #{tpu_custom_call.1} parent=5 // pred_check_branch
        %132 = sbr.rel (%p129) target = $region12
      $region11: #{tpu_custom_call.1} parent=5 // pred_region
        %s133 = ssub.s32 %s15, 1
      $region12: #{tpu_custom_call.1} parent=5 // pred_fallthru
        _
      %p134 = scmp.lt.s32.totalorder %s15, 2
      // Predicated region
      $region13: #{tpu_custom_call.1} parent=5 // pred_check
        %p135 = pneg %p134
      $region14: #{tpu_custom_call.1} parent=5 // pred_check_branch
        %137 = sbr.rel (%p135) target = $region16
      $region15: #{tpu_custom_call.1} parent=5 // pred_region
        // Predicated region
        $region17: #{tpu_custom_call.1} parent=15 // pred_check
          %p138 = pneg %p35
        $region18: #{tpu_custom_call.1} parent=15 // pred_check_branch
          %140 = sbr.rel (%p138) target = $region20
        $region19: #{tpu_custom_call.1} parent=15 // pred_region
          %s141 = sand.u32 %s25, 1
          %s142 = scalar_lea.sflag [#allocation3], %s141
          %s143 = sand.u32 %s25, 1
          %s144 = smul.addr %s143, 256
          %s145 = scalar_lea.vmem [#allocation2], %s144
          %s146 = smul.u32 16, %s15
          %s148 = ssub.s32 4096, 4096
          %149 = vsyncadd %s142, %s148
          %s150 = smul.addr %s146, 2
          %s151 = smul.addr %s150, 128
          %s152 = scalar_lea.hbm %s0, %s151
          %s153 = sshll.u32 %s145, 4
          %s154 = int_to_ptr.vmem [resolvable:$true] %s153
          %159 = dma.hbm_to_vmem [thread:$0]  %s152, 4096, %s154, %s142, 256, 256, 16
        $region20: #{tpu_custom_call.1} parent=15 // pred_fallthru
          _
        // Predicated region
        $region21: #{tpu_custom_call.1} parent=15 // pred_check
          %p160 = pneg %p61
        $region22: #{tpu_custom_call.1} parent=15 // pred_check_branch
          %162 = sbr.rel (%p160) target = $region24
        $region23: #{tpu_custom_call.1} parent=15 // pred_region
          %s163 = sand.u32 %s15, 1
          %s164 = scalar_lea.sflag [#allocation5], %s163
          %s165 = sand.u32 %s51, 1
          %s166 = smul.addr %s165, 256
          %s167 = scalar_lea.vmem [#allocation4], %s166
          %s168 = smul.u32 16, %s15
          %s170 = ssub.s32 4096, 4096
          %171 = vsyncadd %s164, %s170
          %s172 = smul.addr %s168, 2
          %s173 = smul.addr %s172, 128
          %s174 = scalar_lea.hbm %s1, %s173
          %s175 = sshll.u32 %s167, 4
          %s176 = int_to_ptr.vmem [resolvable:$true] %s175
          %181 = dma.hbm_to_vmem [thread:$0]  %s174, 4096, %s176, %s164, 256, 256, 16
        $region24: #{tpu_custom_call.1} parent=15 // pred_fallthru
          _
        // Predicated region
        $region25: #{tpu_custom_call.1} parent=15 // pred_check
          %p182 = pneg %p87
        $region26: #{tpu_custom_call.1} parent=15 // pred_check_branch
          %184 = sbr.rel (%p182) target = $region28
        $region27: #{tpu_custom_call.1} parent=15 // pred_region
          %s185 = sand.u32 %s15, 1
          %s186 = scalar_lea.sflag [#allocation5], %s185
          %s187 = sand.u32 %s77, 1
          %s188 = smul.addr %s187, 256
          %s189 = scalar_lea.vmem [#allocation6], %s188
          %s190 = smul.u32 16, %s15
          %s192 = ssub.s32 4096, 4096
          %193 = vsyncadd %s186, %s192
          %s194 = smul.addr %s190, 2
          %s195 = smul.addr %s194, 128
          %s196 = scalar_lea.hbm %s2, %s195
          %s197 = sshll.u32 %s189, 4
          %s198 = int_to_ptr.vmem [resolvable:$true] %s197
          %203 = dma.hbm_to_vmem [thread:$0]  %s196, 4096, %s198, %s186, 256, 256, 16
        $region28: #{tpu_custom_call.1} parent=15 // pred_fallthru
          _
      $region16: #{tpu_custom_call.1} parent=5 // pred_fallthru
        _
      %p204 = scmp.le.s32.totalorder 1, %s15
      %p205 = scmp.lt.s32.totalorder %s15, 3
      %p206 = pnand %p204, %p205
      %p207 = pneg %p206
      // Predicated region
      $region29: #{tpu_custom_call.1} parent=5 // pred_check
        _
      $region30: #{tpu_custom_call.1} parent=5 // pred_check_branch
        %209 = sbr.rel (%p206) target = $region32
      $region31: #{tpu_custom_call.1} parent=5 // pred_region
        %s210 = ssub.s32 %s15, 1
        %s211 = sand.u32 %s28, 1
        %s212 = scalar_lea.sflag [#allocation3], %s211
        %s213 = sand.u32 %s28, 1
        %s214 = smul.addr %s213, 256
        %s215 = scalar_lea.vmem [#allocation2], %s214
        // Predicated region
        $region33: #{tpu_custom_call.1} parent=31 // pred_check
          %p216 = pneg %p41
        $region34: #{tpu_custom_call.1} parent=31 // pred_check_branch
          %218 = sbr.rel (%p216) target = $region36
        $region35: #{tpu_custom_call.1} parent=31 // pred_region
          %219 = dma.done %s212, 4096
        $region36: #{tpu_custom_call.1} parent=31 // pred_fallthru
          _
        %s220 = sand.u32 %s20, 1
        %s221 = scalar_lea.sflag [#allocation5], %s220
        %s222 = sand.u32 %s54, 1
        %s223 = smul.addr %s222, 256
        %s224 = scalar_lea.vmem [#allocation4], %s223
        // Predicated region
        $region37: #{tpu_custom_call.1} parent=31 // pred_check
          %p225 = pneg %p67
        $region38: #{tpu_custom_call.1} parent=31 // pred_check_branch
          %227 = sbr.rel (%p225) target = $region40
        $region39: #{tpu_custom_call.1} parent=31 // pred_region
          %228 = dma.done %s221, 4096
        $region40: #{tpu_custom_call.1} parent=31 // pred_fallthru
          _
        %s229 = sand.u32 %s20, 1
        %s230 = scalar_lea.sflag [#allocation5], %s229
        %s231 = sand.u32 %s80, 1
        %s232 = smul.addr %s231, 256
        %s233 = scalar_lea.vmem [#allocation6], %s232
        // Predicated region
        $region41: #{tpu_custom_call.1} parent=31 // pred_check
          %p234 = pneg %p93
        $region42: #{tpu_custom_call.1} parent=31 // pred_check_branch
          %236 = sbr.rel (%p234) target = $region44
        $region43: #{tpu_custom_call.1} parent=31 // pred_region
          %237 = dma.done %s230, 4096
        $region44: #{tpu_custom_call.1} parent=31 // pred_fallthru
          _
        %s238 = sand.u32 %s28, 1
        %s239 = scalar_lea.sflag [#allocation3], %s238
        %s240 = sand.u32 %s28, 1
        %s241 = smul.addr %s240, 256
        %s242 = scalar_lea.vmem [#allocation2], %s241
        %p243 = pneg %p41
        %p244 = pneg %p38
        %s245 = sand.u32 %s20, 1
        %s246 = scalar_lea.sflag [#allocation5], %s245
        %s247 = sand.u32 %s54, 1
        %s248 = smul.addr %s247, 256
        %s249 = scalar_lea.vmem [#allocation4], %s248
        %p250 = pneg %p67
        %p251 = pneg %p64
        %s252 = sand.u32 %s20, 1
        %s253 = scalar_lea.sflag [#allocation5], %s252
        %s254 = sand.u32 %s80, 1
        %s255 = smul.addr %s254, 256
        %s256 = scalar_lea.vmem [#allocation6], %s255
        %p257 = pneg %p93
        %p258 = pneg %p90
        %p259 = pneg %p119
        %p260 = pneg %p116
        %s261 = smul.u32 16, %s20
        %p262 = scmp.lt.s32.totalorder %s261, 31
        %s263 = scalar_select %p262, %s261, 31
        %s264 = smul.addr %s263, 8
        %s265 = scalar_lea.vmem %s3, %s264
        %s266 = smul.u32 16, %s20
        %s267 = smul.u32 16, %s20
        %s268 = smul.u32 16, %s20
        %s269 = smul.u32 16, %s20
        %p270 = scmp.lt.s32.totalorder %s269, 31
        %s271 = scalar_select %p270, %s269, 31
        %s272 = smul.addr %s271, 8
        %s273 = scalar_lea.vmem %s3, %s272
        %s274 = smul.u32 16, %s20
        %v275 = vld [vmem:[%s215] sm:$0xff]
        %v276 = vld [vmem:[%s215 + $0x8] sm:$0xff]
        %v277 = vld [vmem:[%s215 + $0x10] sm:$0xff]
        %v278 = vld [vmem:[%s215 + $0x18] sm:$0xff]
        %v279 = vld [vmem:[%s215 + $0x20] sm:$0xff]
        %v280 = vld [vmem:[%s215 + $0x28] sm:$0xff]
        %v281 = vld [vmem:[%s215 + $0x30] sm:$0xff]
        %v282 = vld [vmem:[%s215 + $0x38] sm:$0xff]
        %v283 = vld [vmem:[%s215 + $0x40] sm:$0xff]
        %v284 = vld [vmem:[%s215 + $0x48] sm:$0xff]
        %v285 = vld [vmem:[%s215 + $0x50] sm:$0xff]
        %v286 = vld [vmem:[%s215 + $0x58] sm:$0xff]
        %v287 = vld [vmem:[%s215 + $0x60] sm:$0xff]
        %v288 = vld [vmem:[%s215 + $0x68] sm:$0xff]
        %v289 = vld [vmem:[%s215 + $0x70] sm:$0xff]
        %v290 = vld [vmem:[%s215 + $0x78] sm:$0xff]
        %v291 = vld [vmem:[%s215 + $0x80] sm:$0xff]
        %v292 = vld [vmem:[%s215 + $0x88] sm:$0xff]
        %v293 = vld [vmem:[%s215 + $0x90] sm:$0xff]
        %v294 = vld [vmem:[%s215 + $0x98] sm:$0xff]
        %v295 = vld [vmem:[%s215 + $0xa0] sm:$0xff]
        %v296 = vld [vmem:[%s215 + $0xa8] sm:$0xff]
        %v297 = vld [vmem:[%s215 + $0xb0] sm:$0xff]
        %v298 = vld [vmem:[%s215 + $0xb8] sm:$0xff]
        %v299 = vld [vmem:[%s215 + $0xc0] sm:$0xff]
        %v300 = vld [vmem:[%s215 + $0xc8] sm:$0xff]
        %v301 = vld [vmem:[%s215 + $0xd0] sm:$0xff]
        %v302 = vld [vmem:[%s215 + $0xd8] sm:$0xff]
        %v303 = vld [vmem:[%s215 + $0xe0] sm:$0xff]
        %v304 = vld [vmem:[%s215 + $0xe8] sm:$0xff]
        %v305 = vld [vmem:[%s215 + $0xf0] sm:$0xff]
        %v306 = vld [vmem:[%s215 + $0xf8] sm:$0xff]
        %v307 = vmul.f32 %v275, 14.285714
        %v308 = vmul.f32 %v276, 14.285714
        %v309 = vmul.f32 %v277, 14.285714
        %v310 = vmul.f32 %v278, 14.285714
        %v311 = vmul.f32 %v279, 14.285714
        %v312 = vmul.f32 %v280, 14.285714
        %v313 = vmul.f32 %v281, 14.285714
        %v314 = vmul.f32 %v282, 14.285714
        %v315 = vmul.f32 %v283, 14.285714
        %v316 = vmul.f32 %v284, 14.285714
        %v317 = vmul.f32 %v285, 14.285714
        %v318 = vmul.f32 %v286, 14.285714
        %v319 = vmul.f32 %v287, 14.285714
        %v320 = vmul.f32 %v288, 14.285714
        %v321 = vmul.f32 %v289, 14.285714
        %v322 = vmul.f32 %v290, 14.285714
        %v323 = vmul.f32 %v291, 14.285714
        %v324 = vmul.f32 %v292, 14.285714
        %v325 = vmul.f32 %v293, 14.285714
        %v326 = vmul.f32 %v294, 14.285714
        %v327 = vmul.f32 %v295, 14.285714
        %v328 = vmul.f32 %v296, 14.285714
        %v329 = vmul.f32 %v297, 14.285714
        %v330 = vmul.f32 %v298, 14.285714
        %v331 = vmul.f32 %v299, 14.285714
        %v332 = vmul.f32 %v300, 14.285714
        %v333 = vmul.f32 %v301, 14.285714
        %v334 = vmul.f32 %v302, 14.285714
        %v335 = vmul.f32 %v303, 14.285714
        %v336 = vmul.f32 %v304, 14.285714
        %v337 = vmul.f32 %v305, 14.285714
        %v338 = vmul.f32 %v306, 14.285714
        %v339 = vld [vmem:[%s224] sm:$0xff]
        %v340 = vld [vmem:[%s224 + $0x8] sm:$0xff]
        %v341 = vld [vmem:[%s224 + $0x10] sm:$0xff]
        %v342 = vld [vmem:[%s224 + $0x18] sm:$0xff]
        %v343 = vld [vmem:[%s224 + $0x20] sm:$0xff]
        %v344 = vld [vmem:[%s224 + $0x28] sm:$0xff]
        %v345 = vld [vmem:[%s224 + $0x30] sm:$0xff]
        %v346 = vld [vmem:[%s224 + $0x38] sm:$0xff]
        %v347 = vld [vmem:[%s224 + $0x40] sm:$0xff]
        %v348 = vld [vmem:[%s224 + $0x48] sm:$0xff]
        %v349 = vld [vmem:[%s224 + $0x50] sm:$0xff]
        %v350 = vld [vmem:[%s224 + $0x58] sm:$0xff]
        %v351 = vld [vmem:[%s224 + $0x60] sm:$0xff]
        %v352 = vld [vmem:[%s224 + $0x68] sm:$0xff]
        %v353 = vld [vmem:[%s224 + $0x70] sm:$0xff]
        %v354 = vld [vmem:[%s224 + $0x78] sm:$0xff]
        %v355 = vld [vmem:[%s224 + $0x80] sm:$0xff]
        %v356 = vld [vmem:[%s224 + $0x88] sm:$0xff]
        %v357 = vld [vmem:[%s224 + $0x90] sm:$0xff]
        %v358 = vld [vmem:[%s224 + $0x98] sm:$0xff]
        %v359 = vld [vmem:[%s224 + $0xa0] sm:$0xff]
        %v360 = vld [vmem:[%s224 + $0xa8] sm:$0xff]
        %v361 = vld [vmem:[%s224 + $0xb0] sm:$0xff]
        %v362 = vld [vmem:[%s224 + $0xb8] sm:$0xff]
        %v363 = vld [vmem:[%s224 + $0xc0] sm:$0xff]
        %v364 = vld [vmem:[%s224 + $0xc8] sm:$0xff]
        %v365 = vld [vmem:[%s224 + $0xd0] sm:$0xff]
        %v366 = vld [vmem:[%s224 + $0xd8] sm:$0xff]
        %v367 = vld [vmem:[%s224 + $0xe0] sm:$0xff]
        %v368 = vld [vmem:[%s224 + $0xe8] sm:$0xff]
        %v369 = vld [vmem:[%s224 + $0xf0] sm:$0xff]
        %v370 = vld [vmem:[%s224 + $0xf8] sm:$0xff]
        %v371 = vmax.f32 %v307, %v308
        %372 = vmax.xlane.f32.xlu0 %v371
        %v373 = vpop.xlane.xlu0 %372
        %v374 = vmax.f32 %v309, %v310
        %375 = vmax.xlane.f32.xlu0 %v374
        %v376 = vpop.xlane.xlu0 %375
        %v377 = vmax.f32 %v311, %v312
        %378 = vmax.xlane.f32.xlu0 %v377
        %v379 = vpop.xlane.xlu0 %378
        %v380 = vmax.f32 %v313, %v314
        %381 = vmax.xlane.f32.xlu0 %v380
        %v382 = vpop.xlane.xlu0 %381
        %v383 = vmax.f32 %v315, %v316
        %384 = vmax.xlane.f32.xlu0 %v383
        %v385 = vpop.xlane.xlu0 %384
        %v386 = vmax.f32 %v317, %v318
        %387 = vmax.xlane.f32.xlu0 %v386
        %v388 = vpop.xlane.xlu0 %387
        %v389 = vmax.f32 %v319, %v320
        %390 = vmax.xlane.f32.xlu0 %v389
        %v391 = vpop.xlane.xlu0 %390
        %v392 = vmax.f32 %v321, %v322
        %393 = vmax.xlane.f32.xlu0 %v392
        %v394 = vpop.xlane.xlu0 %393
        %v395 = vmax.f32 %v323, %v324
        %396 = vmax.xlane.f32.xlu0 %v395
        %v397 = vpop.xlane.xlu0 %396
        %v398 = vmax.f32 %v325, %v326
        %399 = vmax.xlane.f32.xlu0 %v398
        %v400 = vpop.xlane.xlu0 %399
        %v401 = vmax.f32 %v327, %v328
        %402 = vmax.xlane.f32.xlu0 %v401
        %v403 = vpop.xlane.xlu0 %402
        %v404 = vmax.f32 %v329, %v330
        %405 = vmax.xlane.f32.xlu0 %v404
        %v406 = vpop.xlane.xlu0 %405
        %v407 = vmax.f32 %v331, %v332
        %408 = vmax.xlane.f32.xlu0 %v407
        %v409 = vpop.xlane.xlu0 %408
        %v410 = vmax.f32 %v333, %v334
        %411 = vmax.xlane.f32.xlu0 %v410
        %v412 = vpop.xlane.xlu0 %411
        %v413 = vmax.f32 %v335, %v336
        %414 = vmax.xlane.f32.xlu0 %v413
        %v415 = vpop.xlane.xlu0 %414
        %v416 = vmax.f32 %v337, %v338
        %417 = vmax.xlane.f32.xlu0 %v416
        %v418 = vpop.xlane.xlu0 %417
        %v419 = vsub.f32 %v307, %v373
        %v420 = vsub.f32 %v308, %v373
        %v421 = vsub.f32 %v309, %v376
        %v422 = vsub.f32 %v310, %v376
        %v423 = vsub.f32 %v311, %v379
        %v424 = vsub.f32 %v312, %v379
        %v425 = vsub.f32 %v313, %v382
        %v426 = vsub.f32 %v314, %v382
        %v427 = vsub.f32 %v315, %v385
        %v428 = vsub.f32 %v316, %v385
        %v429 = vsub.f32 %v317, %v388
        %v430 = vsub.f32 %v318, %v388
        %v431 = vsub.f32 %v319, %v391
        %v432 = vsub.f32 %v320, %v391
        %v433 = vsub.f32 %v321, %v394
        %v434 = vsub.f32 %v322, %v394
        %v435 = vsub.f32 %v323, %v397
        %v436 = vsub.f32 %v324, %v397
        %v437 = vsub.f32 %v325, %v400
        %v438 = vsub.f32 %v326, %v400
        %v439 = vsub.f32 %v327, %v403
        %v440 = vsub.f32 %v328, %v403
        %v441 = vsub.f32 %v329, %v406
        %v442 = vsub.f32 %v330, %v406
        %v443 = vsub.f32 %v331, %v409
        %v444 = vsub.f32 %v332, %v409
        %v445 = vsub.f32 %v333, %v412
        %v446 = vsub.f32 %v334, %v412
        %v447 = vsub.f32 %v335, %v415
        %v448 = vsub.f32 %v336, %v415
        %v449 = vsub.f32 %v337, %v418
        %v450 = vsub.f32 %v338, %v418
        %v451 = vmul.f32 %v419, 1.442695
        %v452 = vpow.pop %v451
        %v453 = vmul.f32 %v420, 1.442695
        %v454 = vpow.pop %v453
        %v455 = vmul.f32 %v421, 1.442695
        %v456 = vpow.pop %v455
        %v457 = vmul.f32 %v422, 1.442695
        %v458 = vpow.pop %v457
        %v459 = vmul.f32 %v423, 1.442695
        %v460 = vpow.pop %v459
        %v461 = vmul.f32 %v424, 1.442695
        %v462 = vpow.pop %v461
        %v463 = vmul.f32 %v425, 1.442695
        %v464 = vpow.pop %v463
        %v465 = vmul.f32 %v426, 1.442695
        %v466 = vpow.pop %v465
        %v467 = vmul.f32 %v427, 1.442695
        %v468 = vpow.pop %v467
        %v469 = vmul.f32 %v428, 1.442695
        %v470 = vpow.pop %v469
        %v471 = vmul.f32 %v429, 1.442695
        %v472 = vpow.pop %v471
        %v473 = vmul.f32 %v430, 1.442695
        %v474 = vpow.pop %v473
        %v475 = vmul.f32 %v431, 1.442695
        %v476 = vpow.pop %v475
        %v477 = vmul.f32 %v432, 1.442695
        %v478 = vpow.pop %v477
        %v479 = vmul.f32 %v433, 1.442695
        %v480 = vpow.pop %v479
        %v481 = vmul.f32 %v434, 1.442695
        %v482 = vpow.pop %v481
        %v483 = vmul.f32 %v435, 1.442695
        %v484 = vpow.pop %v483
        %v485 = vmul.f32 %v436, 1.442695
        %v486 = vpow.pop %v485
        %v487 = vmul.f32 %v437, 1.442695
        %v488 = vpow.pop %v487
        %v489 = vmul.f32 %v438, 1.442695
        %v490 = vpow.pop %v489
        %v491 = vmul.f32 %v439, 1.442695
        %v492 = vpow.pop %v491
        %v493 = vmul.f32 %v440, 1.442695
        %v494 = vpow.pop %v493
        %v495 = vmul.f32 %v441, 1.442695
        %v496 = vpow.pop %v495
        %v497 = vmul.f32 %v442, 1.442695
        %v498 = vpow.pop %v497
        %v499 = vmul.f32 %v443, 1.442695
        %v500 = vpow.pop %v499
        %v501 = vmul.f32 %v444, 1.442695
        %v502 = vpow.pop %v501
        %v503 = vmul.f32 %v445, 1.442695
        %v504 = vpow.pop %v503
        %v505 = vmul.f32 %v446, 1.442695
        %v506 = vpow.pop %v505
        %v507 = vmul.f32 %v447, 1.442695
        %v508 = vpow.pop %v507
        %v509 = vmul.f32 %v448, 1.442695
        %v510 = vpow.pop %v509
        %v511 = vmul.f32 %v449, 1.442695
        %v512 = vpow.pop %v511
        %v513 = vmul.f32 %v450, 1.442695
        %v514 = vpow.pop %v513
        %v515 = vld [vmem:[%s233] sm:$0xff]
        %v516 = vld [vmem:[%s233 + $0x8] sm:$0xff]
        %v517 = vld [vmem:[%s233 + $0x10] sm:$0xff]
        %v518 = vld [vmem:[%s233 + $0x18] sm:$0xff]
        %v519 = vld [vmem:[%s233 + $0x20] sm:$0xff]
        %v520 = vld [vmem:[%s233 + $0x28] sm:$0xff]
        %v521 = vld [vmem:[%s233 + $0x30] sm:$0xff]
        %v522 = vld [vmem:[%s233 + $0x38] sm:$0xff]
        %v523 = vld [vmem:[%s233 + $0x40] sm:$0xff]
        %v524 = vld [vmem:[%s233 + $0x48] sm:$0xff]
        %v525 = vld [vmem:[%s233 + $0x50] sm:$0xff]
        %v526 = vld [vmem:[%s233 + $0x58] sm:$0xff]
        %v527 = vld [vmem:[%s233 + $0x60] sm:$0xff]
        %v528 = vld [vmem:[%s233 + $0x68] sm:$0xff]
        %v529 = vld [vmem:[%s233 + $0x70] sm:$0xff]
        %v530 = vld [vmem:[%s233 + $0x78] sm:$0xff]
        %v531 = vld [vmem:[%s233 + $0x80] sm:$0xff]
        %v532 = vld [vmem:[%s233 + $0x88] sm:$0xff]
        %v533 = vld [vmem:[%s233 + $0x90] sm:$0xff]
        %v534 = vld [vmem:[%s233 + $0x98] sm:$0xff]
        %v535 = vld [vmem:[%s233 + $0xa0] sm:$0xff]
        %v536 = vld [vmem:[%s233 + $0xa8] sm:$0xff]
        %v537 = vld [vmem:[%s233 + $0xb0] sm:$0xff]
        %v538 = vld [vmem:[%s233 + $0xb8] sm:$0xff]
        %v539 = vld [vmem:[%s233 + $0xc0] sm:$0xff]
        %v540 = vld [vmem:[%s233 + $0xc8] sm:$0xff]
        %v541 = vld [vmem:[%s233 + $0xd0] sm:$0xff]
        %v542 = vld [vmem:[%s233 + $0xd8] sm:$0xff]
        %v543 = vld [vmem:[%s233 + $0xe0] sm:$0xff]
        %v544 = vld [vmem:[%s233 + $0xe8] sm:$0xff]
        %v545 = vld [vmem:[%s233 + $0xf0] sm:$0xff]
        %v546 = vld [vmem:[%s233 + $0xf8] sm:$0xff]
        %v547 = vmul.f32 %v452, %v515
        %v548 = vmul.f32 %v454, %v516
        %v549 = vmul.f32 %v456, %v517
        %v550 = vmul.f32 %v458, %v518
        %v551 = vmul.f32 %v460, %v519
        %v552 = vmul.f32 %v462, %v520
        %v553 = vmul.f32 %v464, %v521
        %v554 = vmul.f32 %v466, %v522
        %v555 = vmul.f32 %v468, %v523
        %v556 = vmul.f32 %v470, %v524
        %v557 = vmul.f32 %v472, %v525
        %v558 = vmul.f32 %v474, %v526
        %v559 = vmul.f32 %v476, %v527
        %v560 = vmul.f32 %v478, %v528
        %v561 = vmul.f32 %v480, %v529
        %v562 = vmul.f32 %v482, %v530
        %v563 = vmul.f32 %v484, %v531
        %v564 = vmul.f32 %v486, %v532
        %v565 = vmul.f32 %v488, %v533
        %v566 = vmul.f32 %v490, %v534
        %v567 = vmul.f32 %v492, %v535
        %v568 = vmul.f32 %v494, %v536
        %v569 = vmul.f32 %v496, %v537
        %v570 = vmul.f32 %v498, %v538
        %v571 = vmul.f32 %v500, %v539
        %v572 = vmul.f32 %v502, %v540
        %v573 = vmul.f32 %v504, %v541
        %v574 = vmul.f32 %v506, %v542
        %v575 = vmul.f32 %v508, %v543
        %v576 = vmul.f32 %v510, %v544
        %v577 = vmul.f32 %v512, %v545
        %v578 = vmul.f32 %v514, %v546
        %v579 = vadd.f32 %v547, %v548
        %580 = vadd.xlane.f32.xlu0 %v579
        %v581 = vpop.xlane.xlu0 %580
        %v582 = vadd.f32 %v549, %v550
        %583 = vadd.xlane.f32.xlu0 %v582
        %v584 = vpop.xlane.xlu0 %583
        %v585 = vadd.f32 %v551, %v552
        %586 = vadd.xlane.f32.xlu0 %v585
        %v587 = vpop.xlane.xlu0 %586
        %v588 = vadd.f32 %v553, %v554
        %589 = vadd.xlane.f32.xlu0 %v588
        %v590 = vpop.xlane.xlu0 %589
        %v591 = vadd.f32 %v555, %v556
        %592 = vadd.xlane.f32.xlu0 %v591
        %v593 = vpop.xlane.xlu0 %592
        %v594 = vadd.f32 %v557, %v558
        %595 = vadd.xlane.f32.xlu0 %v594
        %v596 = vpop.xlane.xlu0 %595
        %v597 = vadd.f32 %v559, %v560
        %598 = vadd.xlane.f32.xlu0 %v597
        %v599 = vpop.xlane.xlu0 %598
        %v600 = vadd.f32 %v561, %v562
        %601 = vadd.xlane.f32.xlu0 %v600
        %v602 = vpop.xlane.xlu0 %601
        %v603 = vadd.f32 %v563, %v564
        %604 = vadd.xlane.f32.xlu0 %v603
        %v605 = vpop.xlane.xlu0 %604
        %v606 = vadd.f32 %v565, %v566
        %607 = vadd.xlane.f32.xlu0 %v606
        %v608 = vpop.xlane.xlu0 %607
        %v609 = vadd.f32 %v567, %v568
        %610 = vadd.xlane.f32.xlu0 %v609
        %v611 = vpop.xlane.xlu0 %610
        %v612 = vadd.f32 %v569, %v570
        %613 = vadd.xlane.f32.xlu0 %v612
        %v614 = vpop.xlane.xlu0 %613
        %v615 = vadd.f32 %v571, %v572
        %616 = vadd.xlane.f32.xlu0 %v615
        %v617 = vpop.xlane.xlu0 %616
        %v618 = vadd.f32 %v573, %v574
        %619 = vadd.xlane.f32.xlu0 %v618
        %v620 = vpop.xlane.xlu0 %619
        %v621 = vadd.f32 %v575, %v576
        %622 = vadd.xlane.f32.xlu0 %v621
        %v623 = vpop.xlane.xlu0 %622
        %v624 = vadd.f32 %v577, %v578
        %625 = vadd.xlane.f32.xlu0 %v624
        %v626 = vpop.xlane.xlu0 %625
        %v627 = vadd.f32 %v581, 1e-12
        %v628 = vadd.f32 %v584, 1e-12
        %v629 = vadd.f32 %v587, 1e-12
        %v630 = vadd.f32 %v590, 1e-12
        %v631 = vadd.f32 %v593, 1e-12
        %v632 = vadd.f32 %v596, 1e-12
        %v633 = vadd.f32 %v599, 1e-12
        %v634 = vadd.f32 %v602, 1e-12
        %v635 = vadd.f32 %v605, 1e-12
        %v636 = vadd.f32 %v608, 1e-12
        %v637 = vadd.f32 %v611, 1e-12
        %v638 = vadd.f32 %v614, 1e-12
        %v639 = vadd.f32 %v617, 1e-12
        %v640 = vadd.f32 %v620, 1e-12
        %v641 = vadd.f32 %v623, 1e-12
        %v642 = vadd.f32 %v626, 1e-12
        %v643 = vadd.f32 %v339, %v340
        %644 = vadd.xlane.f32.xlu0 %v643
        %v645 = vpop.xlane.xlu0 %644
        %v646 = vadd.f32 %v341, %v342
        %647 = vadd.xlane.f32.xlu0 %v646
        %v648 = vpop.xlane.xlu0 %647
        %v649 = vadd.f32 %v343, %v344
        %650 = vadd.xlane.f32.xlu0 %v649
        %v651 = vpop.xlane.xlu0 %650
        %v652 = vadd.f32 %v345, %v346
        %653 = vadd.xlane.f32.xlu0 %v652
        %v654 = vpop.xlane.xlu0 %653
        %v655 = vadd.f32 %v347, %v348
        %656 = vadd.xlane.f32.xlu0 %v655
        %v657 = vpop.xlane.xlu0 %656
        %v658 = vadd.f32 %v349, %v350
        %659 = vadd.xlane.f32.xlu0 %v658
        %v660 = vpop.xlane.xlu0 %659
        %v661 = vadd.f32 %v351, %v352
        %662 = vadd.xlane.f32.xlu0 %v661
        %v663 = vpop.xlane.xlu0 %662
        %v664 = vadd.f32 %v353, %v354
        %665 = vadd.xlane.f32.xlu0 %v664
        %v666 = vpop.xlane.xlu0 %665
        %v667 = vadd.f32 %v355, %v356
        %668 = vadd.xlane.f32.xlu0 %v667
        %v669 = vpop.xlane.xlu0 %668
        %v670 = vadd.f32 %v357, %v358
        %671 = vadd.xlane.f32.xlu0 %v670
        %v672 = vpop.xlane.xlu0 %671
        %v673 = vadd.f32 %v359, %v360
        %674 = vadd.xlane.f32.xlu0 %v673
        %v675 = vpop.xlane.xlu0 %674
        %v676 = vadd.f32 %v361, %v362
        %677 = vadd.xlane.f32.xlu0 %v676
        %v678 = vpop.xlane.xlu0 %677
        %v679 = vadd.f32 %v363, %v364
        %680 = vadd.xlane.f32.xlu0 %v679
        %v681 = vpop.xlane.xlu0 %680
        %v682 = vadd.f32 %v365, %v366
        %683 = vadd.xlane.f32.xlu0 %v682
        %v684 = vpop.xlane.xlu0 %683
        %v685 = vadd.f32 %v367, %v368
        %686 = vadd.xlane.f32.xlu0 %v685
        %v687 = vpop.xlane.xlu0 %686
        %v688 = vadd.f32 %v369, %v370
        %689 = vadd.xlane.f32.xlu0 %v688
        %v690 = vpop.xlane.xlu0 %689
        %v691 = vmul.f32 %v339, %v419
        %v692 = vmul.f32 %v340, %v420
        %v693 = vmul.f32 %v341, %v421
        %v694 = vmul.f32 %v342, %v422
        %v695 = vmul.f32 %v343, %v423
        %v696 = vmul.f32 %v344, %v424
        %v697 = vmul.f32 %v345, %v425
        %v698 = vmul.f32 %v346, %v426
        %v699 = vmul.f32 %v347, %v427
        %v700 = vmul.f32 %v348, %v428
        %v701 = vmul.f32 %v349, %v429
        %v702 = vmul.f32 %v350, %v430
        %v703 = vmul.f32 %v351, %v431
        %v704 = vmul.f32 %v352, %v432
        %v705 = vmul.f32 %v353, %v433
        %v706 = vmul.f32 %v354, %v434
        %v707 = vmul.f32 %v355, %v435
        %v708 = vmul.f32 %v356, %v436
        %v709 = vmul.f32 %v357, %v437
        %v710 = vmul.f32 %v358, %v438
        %v711 = vmul.f32 %v359, %v439
        %v712 = vmul.f32 %v360, %v440
        %v713 = vmul.f32 %v361, %v441
        %v714 = vmul.f32 %v362, %v442
        %v715 = vmul.f32 %v363, %v443
        %v716 = vmul.f32 %v364, %v444
        %v717 = vmul.f32 %v365, %v445
        %v718 = vmul.f32 %v366, %v446
        %v719 = vmul.f32 %v367, %v447
        %v720 = vmul.f32 %v368, %v448
        %v721 = vmul.f32 %v369, %v449
        %v722 = vmul.f32 %v370, %v450
        %v723 = vadd.f32 %v691, %v692
        %724 = vadd.xlane.f32.xlu0 %v723
        %v725 = vpop.xlane.xlu0 %724
        %v726 = vadd.f32 %v693, %v694
        %727 = vadd.xlane.f32.xlu0 %v726
        %v728 = vpop.xlane.xlu0 %727
        %v729 = vadd.f32 %v695, %v696
        %730 = vadd.xlane.f32.xlu0 %v729
        %v731 = vpop.xlane.xlu0 %730
        %v732 = vadd.f32 %v697, %v698
        %733 = vadd.xlane.f32.xlu0 %v732
        %v734 = vpop.xlane.xlu0 %733
        %v735 = vadd.f32 %v699, %v700
        %736 = vadd.xlane.f32.xlu0 %v735
        %v737 = vpop.xlane.xlu0 %736
        %v738 = vadd.f32 %v701, %v702
        %739 = vadd.xlane.f32.xlu0 %v738
        %v740 = vpop.xlane.xlu0 %739
        %v741 = vadd.f32 %v703, %v704
        %742 = vadd.xlane.f32.xlu0 %v741
        %v743 = vpop.xlane.xlu0 %742
        %v744 = vadd.f32 %v705, %v706
        %745 = vadd.xlane.f32.xlu0 %v744
        %v746 = vpop.xlane.xlu0 %745
        %v747 = vadd.f32 %v707, %v708
        %748 = vadd.xlane.f32.xlu0 %v747
        %v749 = vpop.xlane.xlu0 %748
        %v750 = vadd.f32 %v709, %v710
        %751 = vadd.xlane.f32.xlu0 %v750
        %v752 = vpop.xlane.xlu0 %751
        %v753 = vadd.f32 %v711, %v712
        %754 = vadd.xlane.f32.xlu0 %v753
        %v755 = vpop.xlane.xlu0 %754
        %v756 = vadd.f32 %v713, %v714
        %757 = vadd.xlane.f32.xlu0 %v756
        %v758 = vpop.xlane.xlu0 %757
        %v759 = vadd.f32 %v715, %v716
        %760 = vadd.xlane.f32.xlu0 %v759
        %v761 = vpop.xlane.xlu0 %760
        %v762 = vadd.f32 %v717, %v718
        %763 = vadd.xlane.f32.xlu0 %v762
        %v764 = vpop.xlane.xlu0 %763
        %v765 = vadd.f32 %v719, %v720
        %766 = vadd.xlane.f32.xlu0 %v765
        %v767 = vpop.xlane.xlu0 %766
        %v768 = vadd.f32 %v721, %v722
        %769 = vadd.xlane.f32.xlu0 %v768
        %v770 = vpop.xlane.xlu0 %769
        %v771 = vlog2.pop %v627
        %v772 = vmul.f32 %v771, 0.6931472
        %v773 = vlog2.pop %v628
        %v774 = vmul.f32 %v773, 0.6931472
        %v775 = vlog2.pop %v629
        %v776 = vmul.f32 %v775, 0.6931472
        %v777 = vlog2.pop %v630
        %v778 = vmul.f32 %v777, 0.6931472
        %v779 = vlog2.pop %v631
        %v780 = vmul.f32 %v779, 0.6931472
        %v781 = vlog2.pop %v632
        %v782 = vmul.f32 %v781, 0.6931472
        %v783 = vlog2.pop %v633
        %v784 = vmul.f32 %v783, 0.6931472
        %v785 = vlog2.pop %v634
        %v786 = vmul.f32 %v785, 0.6931472
        %v787 = vlog2.pop %v635
        %v788 = vmul.f32 %v787, 0.6931472
        %v789 = vlog2.pop %v636
        %v790 = vmul.f32 %v789, 0.6931472
        %v791 = vlog2.pop %v637
        %v792 = vmul.f32 %v791, 0.6931472
        %v793 = vlog2.pop %v638
        %v794 = vmul.f32 %v793, 0.6931472
        %v795 = vlog2.pop %v639
        %v796 = vmul.f32 %v795, 0.6931472
        %v797 = vlog2.pop %v640
        %v798 = vmul.f32 %v797, 0.6931472
        %v799 = vlog2.pop %v641
        %v800 = vmul.f32 %v799, 0.6931472
        %v801 = vlog2.pop %v642
        %v802 = vmul.f32 %v801, 0.6931472
        %v803 = vmul.f32 %v772, %v645
        %v804 = vmul.f32 %v774, %v648
        %v805 = vmul.f32 %v776, %v651
        %v806 = vmul.f32 %v778, %v654
        %v807 = vmul.f32 %v780, %v657
        %v808 = vmul.f32 %v782, %v660
        %v809 = vmul.f32 %v784, %v663
        %v810 = vmul.f32 %v786, %v666
        %v811 = vmul.f32 %v788, %v669
        %v812 = vmul.f32 %v790, %v672
        %v813 = vmul.f32 %v792, %v675
        %v814 = vmul.f32 %v794, %v678
        %v815 = vmul.f32 %v796, %v681
        %v816 = vmul.f32 %v798, %v684
        %v817 = vmul.f32 %v800, %v687
        %v818 = vmul.f32 %v802, %v690
        %v819 = vsub.f32 %v725, %v803
        %v820 = vsub.f32 %v728, %v804
        %v821 = vsub.f32 %v731, %v805
        %v822 = vsub.f32 %v734, %v806
        %v823 = vsub.f32 %v737, %v807
        %v824 = vsub.f32 %v740, %v808
        %v825 = vsub.f32 %v743, %v809
        %v826 = vsub.f32 %v746, %v810
        %v827 = vsub.f32 %v749, %v811
        %v828 = vsub.f32 %v752, %v812
        %v829 = vsub.f32 %v755, %v813
        %v830 = vsub.f32 %v758, %v814
        %v831 = vsub.f32 %v761, %v815
        %v832 = vsub.f32 %v764, %v816
        %v833 = vsub.f32 %v767, %v817
        %v834 = vsub.f32 %v770, %v818
        %v835 = vadd.f32 %v645, 1e-06
        %v836 = vadd.f32 %v648, 1e-06
        %v837 = vadd.f32 %v651, 1e-06
        %v838 = vadd.f32 %v654, 1e-06
        %v839 = vadd.f32 %v657, 1e-06
        %v840 = vadd.f32 %v660, 1e-06
        %v841 = vadd.f32 %v663, 1e-06
        %v842 = vadd.f32 %v666, 1e-06
        %v843 = vadd.f32 %v669, 1e-06
        %v844 = vadd.f32 %v672, 1e-06
        %v845 = vadd.f32 %v675, 1e-06
        %v846 = vadd.f32 %v678, 1e-06
        %v847 = vadd.f32 %v681, 1e-06
        %v848 = vadd.f32 %v684, 1e-06
        %v849 = vadd.f32 %v687, 1e-06
        %v850 = vadd.f32 %v690, 1e-06
        %v851 = vrcp.pop %v835
        %v852 = vmul.f32 %v819, %v851
        %v853 = vrcp.pop %v836
        %v854 = vmul.f32 %v820, %v853
        %v855 = vrcp.pop %v837
        %v856 = vmul.f32 %v821, %v855
        %v857 = vrcp.pop %v838
        %v858 = vmul.f32 %v822, %v857
        %v859 = vrcp.pop %v839
        %v860 = vmul.f32 %v823, %v859
        %v861 = vrcp.pop %v840
        %v862 = vmul.f32 %v824, %v861
        %v863 = vrcp.pop %v841
        %v864 = vmul.f32 %v825, %v863
        %v865 = vrcp.pop %v842
        %v866 = vmul.f32 %v826, %v865
        %v867 = vrcp.pop %v843
        %v868 = vmul.f32 %v827, %v867
        %v869 = vrcp.pop %v844
        %v870 = vmul.f32 %v828, %v869
        %v871 = vrcp.pop %v845
        %v872 = vmul.f32 %v829, %v871
        %v873 = vrcp.pop %v846
        %v874 = vmul.f32 %v830, %v873
        %v875 = vrcp.pop %v847
        %v876 = vmul.f32 %v831, %v875
        %v877 = vrcp.pop %v848
        %v878 = vmul.f32 %v832, %v877
        %v879 = vrcp.pop %v849
        %v880 = vmul.f32 %v833, %v879
        %v881 = vrcp.pop %v850
        %v882 = vmul.f32 %v834, %v881
        %v883 = vsub.f32 0.0, %v852
        %v884 = vsub.f32 0.0, %v854
        %v885 = vsub.f32 0.0, %v856
        %v886 = vsub.f32 0.0, %v858
        %v887 = vsub.f32 0.0, %v860
        %v888 = vsub.f32 0.0, %v862
        %v889 = vsub.f32 0.0, %v864
        %v890 = vsub.f32 0.0, %v866
        %v891 = vsub.f32 0.0, %v868
        %v892 = vsub.f32 0.0, %v870
        %v893 = vsub.f32 0.0, %v872
        %v894 = vsub.f32 0.0, %v874
        %v895 = vsub.f32 0.0, %v876
        %v896 = vsub.f32 0.0, %v878
        %v897 = vsub.f32 0.0, %v880
        %v898 = vsub.f32 0.0, %v882
        %vm899 = vcmask 7168
        %900 = vst.msk [vmem:[%s273] sm:$0xff] %vm899, %v883
        %901 = vst.msk [vmem:[%s273 + $0x8] sm:$0xff] %vm899, %v884
        %902 = vst.msk [vmem:[%s273 + $0x10] sm:$0xff] %vm899, %v885
        %903 = vst.msk [vmem:[%s273 + $0x18] sm:$0xff] %vm899, %v886
        %904 = vst.msk [vmem:[%s273 + $0x20] sm:$0xff] %vm899, %v887
        %905 = vst.msk [vmem:[%s273 + $0x28] sm:$0xff] %vm899, %v888
        %906 = vst.msk [vmem:[%s273 + $0x30] sm:$0xff] %vm899, %v889
        %907 = vst.msk [vmem:[%s273 + $0x38] sm:$0xff] %vm899, %v890
        %908 = vst.msk [vmem:[%s273 + $0x40] sm:$0xff] %vm899, %v891
        %909 = vst.msk [vmem:[%s273 + $0x48] sm:$0xff] %vm899, %v892
        %910 = vst.msk [vmem:[%s273 + $0x50] sm:$0xff] %vm899, %v893
        %911 = vst.msk [vmem:[%s273 + $0x58] sm:$0xff] %vm899, %v894
        %912 = vst.msk [vmem:[%s273 + $0x60] sm:$0xff] %vm899, %v895
        %913 = vst.msk [vmem:[%s273 + $0x68] sm:$0xff] %vm899, %v896
        %914 = vst.msk [vmem:[%s273 + $0x70] sm:$0xff] %vm899, %v897
        %915 = vst.msk [vmem:[%s273 + $0x78] sm:$0xff] %vm899, %v898
        %s916 = smul.u32 16, %s20
        %p917 = scmp.lt.s32.totalorder %s916, 31
        %s918 = scalar_select %p917, %s916, 31
        %s919 = smul.addr %s918, 8
        %s920 = scalar_lea.vmem %s3, %s919
        // Predicated region
        $region45: #{tpu_custom_call.1} parent=31 // pred_check
          %p921 = pneg %p116
        $region46: #{tpu_custom_call.1} parent=31 // pred_check_branch
          %923 = sbr.rel (%p921) target = $region48
        $region47: #{tpu_custom_call.1} parent=31 // pred_region
          %s924 = smul.u32 16, %s20
        $region48: #{tpu_custom_call.1} parent=31 // pred_fallthru
          _
      $region32: #{tpu_custom_call.1} parent=5 // pred_fallthru
        _
      %p925 = scmp.le.s32.totalorder 2, %s15
      // Predicated region
      $region49: #{tpu_custom_call.1} parent=5 // pred_check
        %p926 = pneg %p925
      $region50: #{tpu_custom_call.1} parent=5 // pred_check_branch
        %928 = sbr.rel (%p926) target = $region52
      $region51: #{tpu_custom_call.1} parent=5 // pred_region
        %s929 = ssub.s32 %s15, 2
        // Predicated region
        $region53: #{tpu_custom_call.1} parent=51 // pred_check
          %p930 = pneg %p122
        $region54: #{tpu_custom_call.1} parent=51 // pred_check_branch
          %932 = sbr.rel (%p930) target = $region56
        $region55: #{tpu_custom_call.1} parent=51 // pred_region
          %s933 = smul.u32 16, %s21
          %p934 = scmp.lt.s32.totalorder %s933, 31
          %s935 = scalar_select %p934, %s933, 31
          %s936 = smul.addr %s935, 8
          %s937 = scalar_lea.vmem %s3, %s936
        $region56: #{tpu_custom_call.1} parent=51 // pred_fallthru
          _
      $region52: #{tpu_custom_call.1} parent=5 // pred_fallthru
        _
    $region6: #{tpu_custom_call.1} parent=1 // loop_footer
      %s19 = sadd.s32 1, %s15
    $region7: #{tpu_custom_call.1} parent=1 // loop_footer_branch
      %14 = sbr.rel target = $region3
    $region8: #{tpu_custom_call.1} parent=1 // loop_exit
      _
    %938 = vsyncpa [#allocation3], 1
    %s939 = scalar_lea.sflag [#allocation3], 1
    %940 = vsyncpa %s939, 1
    %941 = vsyncpa [#allocation5], 1
    %s942 = scalar_lea.sflag [#allocation5], 1
    %943 = vsyncpa %s942, 1

</llo_original>
